<compile_context>
chip_gen: v6e
topology: v6e:2x2x1
jax: 0.10.0
libtpu: 0.0.40
codegen_flags: <defaults>
</compile_context>

<pallas_src>
import jax
import jax.numpy as jnp
from jax.experimental import pallas as pl
from jax.experimental.pallas import tpu as pltpu


_LANE = 128     # vreg lane width (last dim)
_SUBLANE = 8    # vreg sublane width for f32 (second-to-last dim)


def _round_up(n, m):
    return ((n + m - 1) // m) * m


def _sigmoid(z):
    # exp -> EUP; divide replaced by approximate reciprocal (also EUP slot),
    # leaving the VALU free in the epilogue.
    return pl.reciprocal(1.0 + jnp.exp(-z), approx=True)


def _dense_sigmoid_kernel(x_ref, w_ref, b_ref, o_ref):
    # Single-block path: operands fully VMEM-resident, one MXU matmul.
    z = jnp.dot(x_ref[...], w_ref[...], preferred_element_type=jnp.float32)
    z = z + b_ref[...]                      # (1, N) bias broadcast over rows
    o_ref[...] = _sigmoid(z).astype(o_ref.dtype)


def _dense_sigmoid_tiled_kernel(x_ref, w_ref, b_ref, o_ref, acc_ref):
    # Tiled path: K is the innermost ("arbitrary") reduction axis; the f32
    # accumulator lives in VMEM scratch across K steps.
    k = pl.program_id(2)

    @pl.when(k == 0)
    def _():
        acc_ref[...] = jnp.zeros_like(acc_ref)

    acc_ref[...] += jnp.dot(x_ref[...], w_ref[...],
                            preferred_element_type=jnp.float32)

    @pl.when(k == pl.num_programs(2) - 1)
    def _():
        z = acc_ref[...] + b_ref[...]
        o_ref[...] = _sigmoid(z).astype(o_ref.dtype)


def dense_sigmoid(x, W, b, *, tm=256, tn=256, tk=512):
    """y = sigmoid(x @ W + b) via Pallas.

    The wrapper zero-pads all dims to lane/sublane/MXU-friendly sizes and
    slices the padding off afterwards (zero-padded K rows contribute nothing
    to the matmul; padded output rows/cols are discarded). Small problems run
    a grid-less single-block kernel; larger ones a tiled grid.
    """
    M, K = x.shape
    Kw, N = W.shape
    assert Kw == K and b.shape == (1, N)

    Mp = _round_up(max(M, _SUBLANE), _SUBLANE)
    Kp = _round_up(K, _LANE)
    Np = _round_up(N, _LANE)

    # Grid-less path if the padded operands are comfortably VMEM-resident.
    if Mp <= 512 and Kp <= 1024 and Np <= 1024:
        xp = jnp.pad(x, ((0, Mp - M), (0, Kp - K)))
        Wp = jnp.pad(W, ((0, Kp - K), (0, Np - N)))
        bp = jnp.pad(b, ((0, 0), (0, Np - N)))
        out = pl.pallas_call(
            _dense_sigmoid_kernel,
            out_shape=jax.ShapeDtypeStruct((Mp, Np), jnp.float32),
            in_specs=[
                pl.BlockSpec(memory_space=pltpu.MemorySpace.VMEM),
                pl.BlockSpec(memory_space=pltpu.MemorySpace.VMEM),
                pl.BlockSpec(memory_space=pltpu.MemorySpace.VMEM),
            ],
            out_specs=pl.BlockSpec(memory_space=pltpu.MemorySpace.VMEM),
        )(xp, Wp, bp)
        return out[:M, :N]

    # ---- tiled path for real-size layers ----
    tm = min(tm, Mp)
    tn = min(tn, Np)
    tk = min(tk, Kp)
    Mt = _round_up(Mp, tm)
    Nt = _round_up(Np, tn)
    Kt = _round_up(Kp, tk)

    xp = jnp.pad(x, ((0, Mt - M), (0, Kt - K)))
    Wp = jnp.pad(W, ((0, Kt - K), (0, Nt - N)))
    bp = jnp.pad(b, ((0, 0), (0, Nt - N)))

    grid = (Mt // tm, Nt // tn, Kt // tk)
    out = pl.pallas_call(
        _dense_sigmoid_tiled_kernel,
        out_shape=jax.ShapeDtypeStruct((Mt, Nt), jnp.float32),
        grid_spec=pltpu.PrefetchScalarGridSpec(
            num_scalar_prefetch=0,
            grid=grid,
            in_specs=[
                pl.BlockSpec((tm, tk), lambda i, j, k: (i, k)),
                pl.BlockSpec((tk, tn), lambda i, j, k: (k, j)),
                pl.BlockSpec((1, tn), lambda i, j, k: (0, j)),
            ],
            out_specs=pl.BlockSpec((tm, tn), lambda i, j, k: (i, j)),
            scratch_shapes=[pltpu.VMEM((tm, tn), jnp.float32)],
        ),
        compiler_params=pltpu.CompilerParams(
            dimension_semantics=("parallel", "parallel", "arbitrary"),
            vmem_limit_bytes=32 * 1024 * 1024,
        ),
    )(xp, Wp, bp)
    return out[:M, :N]


if __name__ == "__main__":
    # MyDenseLayer(input_dim, output_dim): W ~ randn(input_dim, output_dim),
    # b ~ randn(1, output_dim). Deterministic init with PRNGKey(0).
    batch, input_dim, output_dim = 8, 32, 16

    key = jax.random.PRNGKey(0)
    kx, kw, kb = jax.random.split(key, 3)
    x = jax.random.normal(kx, (batch, input_dim), dtype=jnp.float32)
    W = jax.random.normal(kw, (input_dim, output_dim), dtype=jnp.float32)
    b = jax.random.normal(kb, (1, output_dim), dtype=jnp.float32)

    out = dense_sigmoid(x, W, b)
    jax.block_until_ready(out)
    ref = jax.nn.sigmoid(x @ W + b)
    assert out.shape == (batch, output_dim)
    # approx reciprocal has ~2^-12 relative error -> loosen tolerance slightly.
    assert jnp.allclose(out, ref, atol=2e-3, rtol=2e-3)

    # Also exercise the tiled (parallel, parallel, arbitrary) path.
    kx2, kw2, kb2 = jax.random.split(jax.random.PRNGKey(1), 3)
    M2, K2, N2 = 512, 1024, 384
    x2 = 0.05 * jax.random.normal(kx2, (M2, K2), dtype=jnp.float32)
    W2 = jax.random.normal(kw2, (K2, N2), dtype=jnp.float32)
    b2 = jax.random.normal(kb2, (1, N2), dtype=jnp.float32)
    out2 = dense_sigmoid(x2, W2, b2)
    jax.block_until_ready(out2)
    ref2 = jax.nn.sigmoid(x2 @ W2 + b2)
    assert out2.shape == (M2, N2)
    assert jnp.allclose(out2, ref2, atol=2e-3, rtol=2e-3)

    print("KERNEL_OK")
</pallas_src>

<mosaic_0001>
module attributes {stable_mosaic.version = 11 : i64} {
  func.func @_dense_sigmoid_kernel(%arg0: memref<8x128xf32, #tpu.memory_space<vmem>>, %arg1: memref<128x128xf32, #tpu.memory_space<vmem>>, %arg2: memref<1x128xf32, #tpu.memory_space<vmem>>, %arg3: memref<8x128xf32, #tpu.memory_space<vmem>>) attributes {dimension_semantics = [], scalar_prefetch = 0 : i64, scratch_operands = 0 : i64, tpu.core_type = #tpu.core_type<tc>} {
    %c0 = arith.constant 0 : index
    %c0_0 = arith.constant 0 : index
    %0 = vector.load %arg0[%c0, %c0_0] : memref<8x128xf32, #tpu.memory_space<vmem>>, vector<8x128xf32>
    %c0_1 = arith.constant 0 : index
    %c0_2 = arith.constant 0 : index
    %1 = vector.load %arg1[%c0_1, %c0_2] : memref<128x128xf32, #tpu.memory_space<vmem>>, vector<128x128xf32>
    %cst = arith.constant dense<0.000000e+00> : vector<8x128xf32>
    %2 = tpu.matmul %0, %1, %cst {dimension_numbers = #tpu.dot_dimension_numbers<[1], [0], [0], [1], [0, 0, 1, 1], [], []>} : vector<8x128xf32>, vector<128x128xf32>, vector<8x128xf32> -> vector<8x128xf32>
    %c0_3 = arith.constant 0 : index
    %c0_4 = arith.constant 0 : index
    %3 = vector.load %arg2[%c0_3, %c0_4] : memref<1x128xf32, #tpu.memory_space<vmem>>, vector<1x128xf32>
    %4 = vector.broadcast %3 : vector<1x128xf32> to vector<8x128xf32>
    %5 = arith.addf %2, %4 : vector<8x128xf32>
    %cst_5 = arith.constant 0.000000e+00 : f32
    %6 = vector.broadcast %cst_5 : f32 to vector<8x128xf32>
    %7 = arith.subf %6, %5 : vector<8x128xf32>
    %8 = math.exp %7 : vector<8x128xf32>
    %cst_6 = arith.constant 1.000000e+00 : f32
    %9 = vector.broadcast %cst_6 : f32 to vector<8x128xf32>
    %10 = arith.addf %9, %8 : vector<8x128xf32>
    %11 = tpu.reciprocal %10 {approx = true} : vector<8x128xf32> -> vector<8x128xf32>
    %c0_7 = arith.constant 0 : index
    %c0_8 = arith.constant 0 : index
    %12 = vector.load %arg3[%c0_7, %c0_8] : memref<8x128xf32, #tpu.memory_space<vmem>>, vector<8x128xf32>
    tpu.vector_store %arg3[%c0_7, %c0_8], %11 {strides = array<i32>} : memref<8x128xf32, #tpu.memory_space<vmem>>, vector<8x128xf32>,
    return
  }
}

</mosaic_0001>

<llo_original>
// kernel: tpu_custom_call.1
$region0: #{tpu_custom_call.1}
  #allocation0 [shape = 'u32[]', space=smem, size = 0x4, offset = 0x4, fixed_abs, tag = 'smem constant byte address 0x4 - core index']
  #allocation1 [shape = 'u32[144,128]{1,0:T(1,128)}', space=vmem, size = 0x12000, scoped, tag = 'internal scratch']
  %s0 = inlined_call_operand.hbm [shape: f32[8,128], index: 0, kind: input, shape index: {}]
  %s1 = inlined_call_operand.hbm [shape: f32[128,128], index: 1, kind: input, shape index: {}]
  %s2 = inlined_call_operand.vmem [shape: f32[1,128], index: 2, kind: input, shape index: {}]
  %s3 = inlined_call_operand.hbm [shape: f32[8,128], index: 3, kind: output, shape index: {}]
  %s4 = sld [smem:[#allocation0]]
  $region30: #{tpu_custom_call.1} parent=0
    _
  %s6 = ssub.s32 1, %s4
  %s7 = scalar_select 0, %s6, %s4
  $region1: #{tpu_custom_call.1} parent=0
    #allocation2 [shape = 'u8[4096]{0}', space=vmem, size = 0x1000, scoped, tag = 'input window, operand 0, single buffered']
    #allocation3 [shape = 's32[1]{0}', space=sflag, size = 0x4, scoped, tag = 'scoped memory for tpu_custom_call.1']
    #allocation4 [shape = 's32[1]{0}', space=sflag, size = 0x4, scoped, tag = 'scoped memory for tpu_custom_call.1']
    #allocation5 [shape = 'u8[65536]{0}', space=vmem, size = 0x10000, scoped, tag = 'input window, operand 1, single buffered']
    #allocation6 [shape = 's32[1]{0}', space=sflag, size = 0x4, scoped, tag = 'scoped memory for tpu_custom_call.1']
    #allocation7 [shape = 'u8[4096]{0}', space=vmem, size = 0x1000, scoped, tag = 'output window, operand 0, single buffered']
    %8 = vsyncpa [#allocation3], 0
    %9 = vsyncpa [#allocation6], 0
    %10 = vsyncpa [#allocation4], 0
    // Predicated region
    $region2: #{tpu_custom_call.1} parent=1 // pred_check
      _
    $region3: #{tpu_custom_call.1} parent=1 // pred_check_branch
      %12 = sbr.rel (0) target = $region5
    $region4: #{tpu_custom_call.1} parent=1 // pred_region
      %s14 = ssub.s32 128, 128
      %15 = vsyncadd [#allocation3], %s14
      %s17 = sshll.u32 [#allocation2], 4
      %s18 = int_to_ptr.vmem [resolvable:$true] %s17
      %20 = dma.hbm_to_vmem [thread:$0]  %s0, 128, %s18, [#allocation3]
    $region5: #{tpu_custom_call.1} parent=1 // pred_fallthru
      _
    // Predicated region
    $region6: #{tpu_custom_call.1} parent=1 // pred_check
      _
    $region7: #{tpu_custom_call.1} parent=1 // pred_check_branch
      %22 = sbr.rel (0) target = $region9
    $region8: #{tpu_custom_call.1} parent=1 // pred_region
      %s24 = ssub.s32 2048, 2048
      %25 = vsyncadd [#allocation6], %s24
      %s26 = sshll.u32 [#allocation5], 4
      %s27 = int_to_ptr.vmem [resolvable:$true] %s26
      %32 = dma.hbm_to_vmem [thread:$0]  %s1, 2048, %s27, [#allocation6], 128, 128, 8
    $region9: #{tpu_custom_call.1} parent=1 // pred_fallthru
      _
    // Predicated region
    $region10: #{tpu_custom_call.1} parent=1 // pred_check
      _
    $region11: #{tpu_custom_call.1} parent=1 // pred_check_branch
      %34 = sbr.rel (0) target = $region13
    $region12: #{tpu_custom_call.1} parent=1 // pred_region
      _
    $region13: #{tpu_custom_call.1} parent=1 // pred_fallthru
      _
    // Predicated region
    $region14: #{tpu_custom_call.1} parent=1 // pred_check
      _
    $region15: #{tpu_custom_call.1} parent=1 // pred_check_branch
      %36 = sbr.rel (0) target = $region17
    $region16: #{tpu_custom_call.1} parent=1 // pred_region
      %37 = dma.done [#allocation3], 128
    $region17: #{tpu_custom_call.1} parent=1 // pred_fallthru
      _
    // Predicated region
    $region18: #{tpu_custom_call.1} parent=1 // pred_check
      _
    $region19: #{tpu_custom_call.1} parent=1 // pred_check_branch
      %39 = sbr.rel (0) target = $region21
    $region20: #{tpu_custom_call.1} parent=1 // pred_region
      %40 = dma.done [#allocation6], 2048
    $region21: #{tpu_custom_call.1} parent=1 // pred_fallthru
      _
    %v41 = vld [vmem:[#allocation2] sm:$0xff]
    %v42 = vld [vmem:[#allocation5] sm:$0xff]
    %v43 = vld [vmem:[#allocation5 + $0x8] sm:$0xff]
    %v44 = vld [vmem:[#allocation5 + $0x10] sm:$0xff]
    %v45 = vld [vmem:[#allocation5 + $0x18] sm:$0xff]
    %v46 = vld [vmem:[#allocation5 + $0x20] sm:$0xff]
    %v47 = vld [vmem:[#allocation5 + $0x28] sm:$0xff]
    %v48 = vld [vmem:[#allocation5 + $0x30] sm:$0xff]
    %v49 = vld [vmem:[#allocation5 + $0x38] sm:$0xff]
    %v50 = vld [vmem:[#allocation5 + $0x40] sm:$0xff]
    %v51 = vld [vmem:[#allocation5 + $0x48] sm:$0xff]
    %v52 = vld [vmem:[#allocation5 + $0x50] sm:$0xff]
    %v53 = vld [vmem:[#allocation5 + $0x58] sm:$0xff]
    %v54 = vld [vmem:[#allocation5 + $0x60] sm:$0xff]
    %v55 = vld [vmem:[#allocation5 + $0x68] sm:$0xff]
    %v56 = vld [vmem:[#allocation5 + $0x70] sm:$0xff]
    %v57 = vld [vmem:[#allocation5 + $0x78] sm:$0xff]
    %v58 = vld [vmem:[%s2] sm:$0x1]
    %v60 = vlaneseq
    %v61 = vshrl.u32 %v60, 7
    %v62 = vsub.s32 0, %v61
    %v63 = vrot.slane %v58, %v62
    %65 = vmatprep.subr.mxu0 0.0
    %66 = vmatpush1.msra.mxu0 %v57
    %67 = vmatprep.subr.mxu0 0.0
    %68 = vmatpush1.msra.mxu0 %v56
    %69 = vmatprep.subr.mxu0 0.0
    %70 = vmatpush1.msra.mxu0 %v55
    %71 = vmatprep.subr.mxu0 0.0
    %72 = vmatpush1.msra.mxu0 %v54
    %73 = vmatprep.subr.mxu0 0.0
    %74 = vmatpush1.msra.mxu0 %v53
    %75 = vmatprep.subr.mxu0 0.0
    %76 = vmatpush1.msra.mxu0 %v52
    %77 = vmatprep.subr.mxu0 0.0
    %78 = vmatpush1.msra.mxu0 %v51
    %79 = vmatprep.subr.mxu0 0.0
    %80 = vmatpush1.msra.mxu0 %v50
    %81 = vmatprep.subr.mxu0 0.0
    %82 = vmatpush1.msra.mxu0 %v49
    %83 = vmatprep.subr.mxu0 0.0
    %84 = vmatpush1.msra.mxu0 %v48
    %85 = vmatprep.subr.mxu0 0.0
    %86 = vmatpush1.msra.mxu0 %v47
    %87 = vmatprep.subr.mxu0 0.0
    %88 = vmatpush1.msra.mxu0 %v46
    %89 = vmatprep.subr.mxu0 0.0
    %90 = vmatpush1.msra.mxu0 %v45
    %91 = vmatprep.subr.mxu0 0.0
    %92 = vmatpush1.msra.mxu0 %v44
    %93 = vmatprep.subr.mxu0 0.0
    %94 = vmatpush1.msra.mxu0 %v43
    %95 = vmatprep.subr.mxu0 0.0
    %96 = vmatpush1.msra.mxu0 %v42
    %97 = vmatprep.subr.mxu0 0.0
    %98 = vmatpush2.msra.mxu0 0.0
    %99 = vmatprep.subr.mxu0 0.0
    %100 = vmatpush2.msra.mxu0 0.0
    %101 = vmatprep.subr.mxu0 0.0
    %102 = vmatpush2.msra.mxu0 0.0
    %103 = vmatprep.subr.mxu0 0.0
    %104 = vmatpush2.msra.mxu0 0.0
    %105 = vmatprep.subr.mxu0 0.0
    %106 = vmatpush2.msra.mxu0 0.0
    %107 = vmatprep.subr.mxu0 0.0
    %108 = vmatpush2.msra.mxu0 0.0
    %109 = vmatprep.subr.mxu0 0.0
    %110 = vmatpush2.msra.mxu0 0.0
    %111 = vmatprep.subr.mxu0 0.0
    %112 = vmatpush2.msra.mxu0 0.0
    %113 = vmatprep.subr.mxu0 0.0
    %114 = vmatpush2.msra.mxu0 0.0
    %115 = vmatprep.subr.mxu0 0.0
    %116 = vmatpush2.msra.mxu0 0.0
    %117 = vmatprep.subr.mxu0 0.0
    %118 = vmatpush2.msra.mxu0 0.0
    %119 = vmatprep.subr.mxu0 0.0
    %120 = vmatpush2.msra.mxu0 0.0
    %121 = vmatprep.subr.mxu0 0.0
    %122 = vmatpush2.msra.mxu0 0.0
    %123 = vmatprep.subr.mxu0 0.0
    %124 = vmatpush2.msra.mxu0 0.0
    %125 = vmatprep.subr.mxu0 0.0
    %126 = vmatpush2.msra.mxu0 0.0
    %127 = vmatprep.subr.mxu0 0.0
    %128 = vmatpush2.msra.mxu0 0.0
    %129 = vmatprep.mubr.f32.mxu0 0.0
    %130 = vmatmul.mubr.f32.gmra.mxu0 %v41
    %v131 = vpop.f32.mrf.mxu0
    %v132 = vadd.f32 %v63, %v131
    %v133 = vpop.f32.mrf.mxu0
    %134 = vdwg.mxu0
    %v135 = vsub.f32 0.0, %v132
    %v136 = vmul.f32 %v135, 1.442695
    %v137 = vpow.pop %v136
    %v138 = vadd.f32 %v137, 1.0
    %v139 = vrcp.pop %v138
    %140 = vst [vmem:[#allocation7] sm:$0xff] %v139
    // Predicated region
    $region22: #{tpu_custom_call.1} parent=1 // pred_check
      _
    $region23: #{tpu_custom_call.1} parent=1 // pred_check_branch
      %142 = sbr.rel (0) target = $region25
    $region24: #{tpu_custom_call.1} parent=1 // pred_region
      %s144 = ssub.s32 128, 128
      %145 = vsyncadd [#allocation4], %s144
      %s147 = sshll.u32 [#allocation7], 4
      %s148 = int_to_ptr.vmem [resolvable:$true] %s147
      %150 = dma.vmem_to_hbm [thread:$0]  %s148, 128, %s3, [#allocation4]
    $region25: #{tpu_custom_call.1} parent=1 // pred_fallthru
      _
    // Predicated region
    $region26: #{tpu_custom_call.1} parent=1 // pred_check
      _
    $region27: #{tpu_custom_call.1} parent=1 // pred_check_branch
      %152 = sbr.rel (0) target = $region29
    $region28: #{tpu_custom_call.1} parent=1 // pred_region
      %153 = dma.done [#allocation4], 128
    $region29: #{tpu_custom_call.1} parent=1 // pred_fallthru
      _
    %154 = vsyncpa [#allocation3], 1
    %155 = vsyncpa [#allocation6], 1
    %156 = vsyncpa [#allocation4], 1

</llo_original>
